<compile_context>
chip_gen: v7x
topology: tpu7x:2x2x1
jax: 0.10.0
libtpu: 0.0.40
codegen_flags: <defaults>
</compile_context>

<pallas_src>
import functools

import jax
import jax.numpy as jnp
from jax import lax
from jax.experimental import pallas as pl
from jax.experimental.pallas import tpu as pltpu

NEG_SLOPE = 0.01  # nn.LeakyReLU default negative_slope
LANE = 128
SUBLANE = 8


def _round_up(n, m):
    return ((n + m - 1) // m) * m


def _leaky_relu(y):
    # single vmul + vmax on the VPU (cheaper than compare + select)
    return jnp.maximum(y, NEG_SLOPE * y)


def _fused_mlp_kernel(x_ref, w1_ref, b1_ref, wm_ref, bm_ref, w2_ref, b2_ref,
                      o_ref, *, hidden_depth):
    # x:(Bp,INp) w1:(INp,Hp) wm:(Hp,Hp) w2:(Hp,OUTp) biases:(1,feat) o:(Bp,OUTp)
    h = _leaky_relu(
        jnp.dot(x_ref[...], w1_ref[...], preferred_element_type=jnp.float32)
        + b1_ref[...])

    def body(_, h):
        return _leaky_relu(
            jnp.dot(h, wm_ref[...], preferred_element_type=jnp.float32)
            + bm_ref[...])

    if hidden_depth > 0:
        h = lax.fori_loop(0, hidden_depth, body, h, unroll=True)

    y = _leaky_relu(
        jnp.dot(h, w2_ref[...], preferred_element_type=jnp.float32)
        + b2_ref[...])
    o_ref[...] = y.astype(o_ref.dtype)


def _pad2(a, rows, cols):
    r, c = a.shape
    return jnp.pad(a, ((0, rows - r), (0, cols - c)))


@functools.partial(jax.jit, static_argnames=("hidden_depth",))
def my_net_forward(x, params, hidden_depth=1):
    """Fused fc1 -> hidden_depth x fc_mid -> fc2 (all + LeakyReLU), one pallas_call."""
    B, IN = x.shape
    H = params["w1"].shape[1]
    OUT = params["w2"].shape[1]

    Bp = _round_up(B, SUBLANE)
    INp = _round_up(IN, LANE)
    Hp = _round_up(H, LANE)
    OUTp = _round_up(OUT, LANE)

    # Zero-pad to lane/sublane-aligned shapes (padded lanes stay exactly zero
    # through every layer since the padded weight rows/cols and bias lanes are
    # zero and leaky_relu(0) == 0).
    x_p = _pad2(x.astype(jnp.float32), Bp, INp)
    w1_p = _pad2(params["w1"], INp, Hp)
    wm_p = _pad2(params["wm"], Hp, Hp)
    w2_p = _pad2(params["w2"], Hp, OUTp)
    b1_p = _pad2(params["b1"].reshape(1, H), 1, Hp)
    bm_p = _pad2(params["bm"].reshape(1, H), 1, Hp)
    b2_p = _pad2(params["b2"].reshape(1, OUT), 1, OUTp)

    vmem = pl.BlockSpec(memory_space=pltpu.MemorySpace.VMEM)
    out_p = pl.pallas_call(
        functools.partial(_fused_mlp_kernel, hidden_depth=hidden_depth),
        out_shape=jax.ShapeDtypeStruct((Bp, OUTp), jnp.float32),
        in_specs=[vmem] * 7,
        out_specs=vmem,
    )(x_p, w1_p, b1_p, wm_p, bm_p, w2_p, b2_p)

    return out_p[:B, :OUT]


def init_params(key, input_size, hidden_size, output_size):
    """Deterministic synthetic params. Weights stored as [in, out]."""
    k1, k2, k3, k4, k5, k6 = jax.random.split(key, 6)

    def lin(kw, kb, fan_in, fan_out):
        bound = 1.0 / jnp.sqrt(fan_in)
        w = jax.random.uniform(kw, (fan_in, fan_out), jnp.float32, -bound, bound)
        b = jax.random.uniform(kb, (fan_out,), jnp.float32, -bound, bound)
        return w, b

    w1, b1 = lin(k1, k2, input_size, hidden_size)   # fc1
    wm, bm = lin(k3, k4, hidden_size, hidden_size)  # fc_mid (shared across loop iters)
    w2, b2 = lin(k5, k6, hidden_size, output_size)  # fc2
    return dict(w1=w1, b1=b1, wm=wm, bm=bm, w2=w2, b2=b2)


def my_net_reference(x, params, hidden_depth=1):
    def layer(h, w, b):
        y = h @ w + b
        return jnp.where(y > 0, y, NEG_SLOPE * y)

    out = layer(x, params["w1"], params["b1"])
    for _ in range(hidden_depth):
        out = layer(out, params["wm"], params["bm"])
    out = layer(out, params["w2"], params["b2"])
    return out


if __name__ == "__main__":
    input_size, hidden_size, output_size, hidden_depth = 32, 32, 16, 2
    batch = 8

    key = jax.random.PRNGKey(0)
    kx, kp = jax.random.split(key)
    x = jax.random.normal(kx, (batch, input_size), dtype=jnp.float32)
    params = init_params(kp, input_size, hidden_size, output_size)

    out = my_net_forward(x, params, hidden_depth=hidden_depth)
    out = jax.block_until_ready(out)

    ref = my_net_reference(x, params, hidden_depth=hidden_depth)
    assert out.shape == (batch, output_size)
    assert jnp.allclose(out, ref, atol=1e-5, rtol=1e-5)

    print("KERNEL_OK")
</pallas_src>

<mosaic_0001>
module attributes {stable_mosaic.version = 11 : i64} {
  func.func @_fused_mlp_kernel(%arg0: memref<8x128xf32, #tpu.memory_space<vmem>>, %arg1: memref<128x128xf32, #tpu.memory_space<vmem>>, %arg2: memref<1x128xf32, #tpu.memory_space<vmem>>, %arg3: memref<128x128xf32, #tpu.memory_space<vmem>>, %arg4: memref<1x128xf32, #tpu.memory_space<vmem>>, %arg5: memref<128x128xf32, #tpu.memory_space<vmem>>, %arg6: memref<1x128xf32, #tpu.memory_space<vmem>>, %arg7: memref<8x128xf32, #tpu.memory_space<vmem>>) attributes {dimension_semantics = [], scalar_prefetch = 0 : i64, scratch_operands = 0 : i64, tpu.core_type = #tpu.core_type<tc>} {
    %c0 = arith.constant 0 : index
    %c0_0 = arith.constant 0 : index
    %0 = vector.load %arg0[%c0, %c0_0] : memref<8x128xf32, #tpu.memory_space<vmem>>, vector<8x128xf32>
    %c0_1 = arith.constant 0 : index
    %c0_2 = arith.constant 0 : index
    %1 = vector.load %arg1[%c0_1, %c0_2] : memref<128x128xf32, #tpu.memory_space<vmem>>, vector<128x128xf32>
    %cst = arith.constant dense<0.000000e+00> : vector<8x128xf32>
    %2 = tpu.matmul %0, %1, %cst {dimension_numbers = #tpu.dot_dimension_numbers<[1], [0], [0], [1], [0, 0, 1, 1], [], []>} : vector<8x128xf32>, vector<128x128xf32>, vector<8x128xf32> -> vector<8x128xf32>
    %c0_3 = arith.constant 0 : index
    %c0_4 = arith.constant 0 : index
    %3 = vector.load %arg2[%c0_3, %c0_4] : memref<1x128xf32, #tpu.memory_space<vmem>>, vector<1x128xf32>
    %4 = vector.broadcast %3 : vector<1x128xf32> to vector<8x128xf32>
    %5 = arith.addf %2, %4 : vector<8x128xf32>
    %cst_5 = arith.constant 0.00999999977 : f32
    %6 = vector.broadcast %cst_5 : f32 to vector<8x128xf32>
    %7 = arith.mulf %6, %5 : vector<8x128xf32>
    %8 = arith.maximumf %5, %7 : vector<8x128xf32>
    %c0_i32 = arith.constant 0 : i32
    %c0_6 = arith.constant 0 : index
    %c0_7 = arith.constant 0 : index
    %9 = vector.load %arg3[%c0_6, %c0_7] : memref<128x128xf32, #tpu.memory_space<vmem>>, vector<128x128xf32>
    %cst_8 = arith.constant dense<0.000000e+00> : vector<8x128xf32>
    %10 = tpu.matmul %8, %9, %cst_8 {dimension_numbers = #tpu.dot_dimension_numbers<[1], [0], [0], [1], [0, 0, 1, 1], [], []>} : vector<8x128xf32>, vector<128x128xf32>, vector<8x128xf32> -> vector<8x128xf32>
    %c0_9 = arith.constant 0 : index
    %c0_10 = arith.constant 0 : index
    %11 = vector.load %arg4[%c0_9, %c0_10] : memref<1x128xf32, #tpu.memory_space<vmem>>, vector<1x128xf32>
    %12 = vector.broadcast %11 : vector<1x128xf32> to vector<8x128xf32>
    %13 = arith.addf %10, %12 : vector<8x128xf32>
    %cst_11 = arith.constant 0.00999999977 : f32
    %14 = vector.broadcast %cst_11 : f32 to vector<8x128xf32>
    %15 = arith.mulf %14, %13 : vector<8x128xf32>
    %16 = arith.maximumf %13, %15 : vector<8x128xf32>
    %c1_i32 = arith.constant 1 : i32
    %c0_12 = arith.constant 0 : index
    %c0_13 = arith.constant 0 : index
    %17 = vector.load %arg3[%c0_12, %c0_13] : memref<128x128xf32, #tpu.memory_space<vmem>>, vector<128x128xf32>
    %cst_14 = arith.constant dense<0.000000e+00> : vector<8x128xf32>
    %18 = tpu.matmul %16, %17, %cst_14 {dimension_numbers = #tpu.dot_dimension_numbers<[1], [0], [0], [1], [0, 0, 1, 1], [], []>} : vector<8x128xf32>, vector<128x128xf32>, vector<8x128xf32> -> vector<8x128xf32>
    %c0_15 = arith.constant 0 : index
    %c0_16 = arith.constant 0 : index
    %19 = vector.load %arg4[%c0_15, %c0_16] : memref<1x128xf32, #tpu.memory_space<vmem>>, vector<1x128xf32>
    %20 = vector.broadcast %19 : vector<1x128xf32> to vector<8x128xf32>
    %21 = arith.addf %18, %20 : vector<8x128xf32>
    %cst_17 = arith.constant 0.00999999977 : f32
    %22 = vector.broadcast %cst_17 : f32 to vector<8x128xf32>
    %23 = arith.mulf %22, %21 : vector<8x128xf32>
    %24 = arith.maximumf %21, %23 : vector<8x128xf32>
    %c0_18 = arith.constant 0 : index
    %c0_19 = arith.constant 0 : index
    %25 = vector.load %arg5[%c0_18, %c0_19] : memref<128x128xf32, #tpu.memory_space<vmem>>, vector<128x128xf32>
    %cst_20 = arith.constant dense<0.000000e+00> : vector<8x128xf32>
    %26 = tpu.matmul %24, %25, %cst_20 {dimension_numbers = #tpu.dot_dimension_numbers<[1], [0], [0], [1], [0, 0, 1, 1], [], []>} : vector<8x128xf32>, vector<128x128xf32>, vector<8x128xf32> -> vector<8x128xf32>
    %c0_21 = arith.constant 0 : index
    %c0_22 = arith.constant 0 : index
    %27 = vector.load %arg6[%c0_21, %c0_22] : memref<1x128xf32, #tpu.memory_space<vmem>>, vector<1x128xf32>
    %28 = vector.broadcast %27 : vector<1x128xf32> to vector<8x128xf32>
    %29 = arith.addf %26, %28 : vector<8x128xf32>
    %cst_23 = arith.constant 0.00999999977 : f32
    %30 = vector.broadcast %cst_23 : f32 to vector<8x128xf32>
    %31 = arith.mulf %30, %29 : vector<8x128xf32>
    %32 = arith.maximumf %29, %31 : vector<8x128xf32>
    %c0_24 = arith.constant 0 : index
    %c0_25 = arith.constant 0 : index
    %33 = vector.load %arg7[%c0_24, %c0_25] : memref<8x128xf32, #tpu.memory_space<vmem>>, vector<8x128xf32>
    tpu.vector_store %arg7[%c0_24, %c0_25], %32 {strides = array<i32>} : memref<8x128xf32, #tpu.memory_space<vmem>>, vector<8x128xf32>,
    return
  }
}

</mosaic_0001>

<llo_original>
// kernel: my_net_forward.1
$region0: #{my_net_forward.1}
  #allocation0 [shape = 'u32[]', space=smem, size = 0x4, offset = 0x4, fixed_abs, tag = 'smem constant byte address 0x4 - core index']
  #allocation1 [shape = 'u32[144,128]{1,0:T(1,128)}', space=vmem, size = 0x12000, scoped, tag = 'internal scratch']
  %s0 = inlined_call_operand.vmem [shape: f32[8,128], index: 0, kind: input, shape index: {}]
  %s1 = inlined_call_operand.vmem [shape: f32[128,128], index: 1, kind: input, shape index: {}]
  %s2 = inlined_call_operand.vmem [shape: f32[1,128], index: 2, kind: input, shape index: {}]
  %s3 = inlined_call_operand.vmem [shape: f32[128,128], index: 3, kind: input, shape index: {}]
  %s4 = inlined_call_operand.vmem [shape: f32[1,128], index: 4, kind: input, shape index: {}]
  %s5 = inlined_call_operand.vmem [shape: f32[128,128], index: 5, kind: input, shape index: {}]
  %s6 = inlined_call_operand.vmem [shape: f32[1,128], index: 6, kind: input, shape index: {}]
  %s7 = inlined_call_operand.hbm [shape: f32[8,128], index: 7, kind: output, shape index: {}]
  %s8 = sld [smem:[#allocation0]]
  $region38: #{my_net_forward.1} parent=0
    _
  %s10 = ssub.s32 1, %s8
  %s11 = scalar_select 0, %s10, %s8
  $region1: #{my_net_forward.1} parent=0
    #allocation2 [shape = 'u8[4096]{0}', space=vmem, size = 0x1000, scoped, tag = 'output window, operand 0, single buffered']
    #allocation3 [shape = 's32[1]{0}', space=sflag, size = 0x4, scoped, tag = 'scoped memory for my_net_forward.1']
    %12 = vsyncpa [#allocation3], 0
    // Predicated region
    $region2: #{my_net_forward.1} parent=1 // pred_check
      _
    $region3: #{my_net_forward.1} parent=1 // pred_check_branch
      %14 = sbr.rel (0) target = $region5
    $region4: #{my_net_forward.1} parent=1 // pred_region
      _
    $region5: #{my_net_forward.1} parent=1 // pred_fallthru
      _
    // Predicated region
    $region6: #{my_net_forward.1} parent=1 // pred_check
      _
    $region7: #{my_net_forward.1} parent=1 // pred_check_branch
      %16 = sbr.rel (0) target = $region9
    $region8: #{my_net_forward.1} parent=1 // pred_region
      _
    $region9: #{my_net_forward.1} parent=1 // pred_fallthru
      _
    // Predicated region
    $region10: #{my_net_forward.1} parent=1 // pred_check
      _
    $region11: #{my_net_forward.1} parent=1 // pred_check_branch
      %18 = sbr.rel (0) target = $region13
    $region12: #{my_net_forward.1} parent=1 // pred_region
      _
    $region13: #{my_net_forward.1} parent=1 // pred_fallthru
      _
    // Predicated region
    $region14: #{my_net_forward.1} parent=1 // pred_check
      _
    $region15: #{my_net_forward.1} parent=1 // pred_check_branch
      %20 = sbr.rel (0) target = $region17
    $region16: #{my_net_forward.1} parent=1 // pred_region
      _
    $region17: #{my_net_forward.1} parent=1 // pred_fallthru
      _
    // Predicated region
    $region18: #{my_net_forward.1} parent=1 // pred_check
      _
    $region19: #{my_net_forward.1} parent=1 // pred_check_branch
      %22 = sbr.rel (0) target = $region21
    $region20: #{my_net_forward.1} parent=1 // pred_region
      _
    $region21: #{my_net_forward.1} parent=1 // pred_fallthru
      _
    // Predicated region
    $region22: #{my_net_forward.1} parent=1 // pred_check
      _
    $region23: #{my_net_forward.1} parent=1 // pred_check_branch
      %24 = sbr.rel (0) target = $region25
    $region24: #{my_net_forward.1} parent=1 // pred_region
      _
    $region25: #{my_net_forward.1} parent=1 // pred_fallthru
      _
    // Predicated region
    $region26: #{my_net_forward.1} parent=1 // pred_check
      _
    $region27: #{my_net_forward.1} parent=1 // pred_check_branch
      %26 = sbr.rel (0) target = $region29
    $region28: #{my_net_forward.1} parent=1 // pred_region
      _
    $region29: #{my_net_forward.1} parent=1 // pred_fallthru
      _
    %v27 = vld [vmem:[%s0] sm:$0xff]
    %v28 = vld [vmem:[%s1] sm:$0xff]
    %v29 = vld [vmem:[%s1 + $0x8] sm:$0xff]
    %v30 = vld [vmem:[%s1 + $0x10] sm:$0xff]
    %v31 = vld [vmem:[%s1 + $0x18] sm:$0xff]
    %v32 = vld [vmem:[%s1 + $0x20] sm:$0xff]
    %v33 = vld [vmem:[%s1 + $0x28] sm:$0xff]
    %v34 = vld [vmem:[%s1 + $0x30] sm:$0xff]
    %v35 = vld [vmem:[%s1 + $0x38] sm:$0xff]
    %v36 = vld [vmem:[%s1 + $0x40] sm:$0xff]
    %v37 = vld [vmem:[%s1 + $0x48] sm:$0xff]
    %v38 = vld [vmem:[%s1 + $0x50] sm:$0xff]
    %v39 = vld [vmem:[%s1 + $0x58] sm:$0xff]
    %v40 = vld [vmem:[%s1 + $0x60] sm:$0xff]
    %v41 = vld [vmem:[%s1 + $0x68] sm:$0xff]
    %v42 = vld [vmem:[%s1 + $0x70] sm:$0xff]
    %v43 = vld [vmem:[%s1 + $0x78] sm:$0xff]
    %v44 = vld [vmem:[%s2] sm:$0x1]
    %v46 = vlaneseq
    %v47 = vshrl.u32 %v46, 7
    %v48 = vsub.s32 0, %v47
    %v49 = vrot.slane %v44, %v48
    %51 = vmatprep.subr.mxu0 0.0
    %52 = vmatpush1.msra.mxu0 %v28
    %53 = vmatprep.subr.mxu0 0.0
    %54 = vmatpush1.msra.mxu0 %v29
    %55 = vmatprep.subr.mxu0 0.0
    %56 = vmatpush1.msra.mxu0 %v30
    %57 = vmatprep.subr.mxu0 0.0
    %58 = vmatpush1.msra.mxu0 %v31
    %59 = vmatprep.subr.mxu0 0.0
    %60 = vmatpush1.msra.mxu0 %v32
    %61 = vmatprep.subr.mxu0 0.0
    %62 = vmatpush1.msra.mxu0 %v33
    %63 = vmatprep.subr.mxu0 0.0
    %64 = vmatpush1.msra.mxu0 %v34
    %65 = vmatprep.subr.mxu0 0.0
    %66 = vmatpush1.msra.mxu0 %v35
    %67 = vmatprep.subr.mxu0 0.0
    %68 = vmatpush1.msra.mxu0 %v36
    %69 = vmatprep.subr.mxu0 0.0
    %70 = vmatpush1.msra.mxu0 %v37
    %71 = vmatprep.subr.mxu0 0.0
    %72 = vmatpush1.msra.mxu0 %v38
    %73 = vmatprep.subr.mxu0 0.0
    %74 = vmatpush1.msra.mxu0 %v39
    %75 = vmatprep.subr.mxu0 0.0
    %76 = vmatpush1.msra.mxu0 %v40
    %77 = vmatprep.subr.mxu0 0.0
    %78 = vmatpush1.msra.mxu0 %v41
    %79 = vmatprep.subr.mxu0 0.0
    %80 = vmatpush1.msra.mxu0 %v42
    %81 = vmatprep.subr.mxu0 0.0
    %82 = vmatpush1.msra.mxu0 %v43
    %83 = vmatprep.subr.mxu0 0.0
    %84 = vmatpush1.msra.mxu0 0.0
    %85 = vmatprep.subr.mxu0 0.0
    %86 = vmatpush1.msra.mxu0 0.0
    %87 = vmatprep.subr.mxu0 0.0
    %88 = vmatpush1.msra.mxu0 0.0
    %89 = vmatprep.subr.mxu0 0.0
    %90 = vmatpush1.msra.mxu0 0.0
    %91 = vmatprep.subr.mxu0 0.0
    %92 = vmatpush1.msra.mxu0 0.0
    %93 = vmatprep.subr.mxu0 0.0
    %94 = vmatpush1.msra.mxu0 0.0
    %95 = vmatprep.subr.mxu0 0.0
    %96 = vmatpush1.msra.mxu0 0.0
    %97 = vmatprep.subr.mxu0 0.0
    %98 = vmatpush1.msra.mxu0 0.0
    %99 = vmatprep.subr.mxu0 0.0
    %100 = vmatpush1.msra.mxu0 0.0
    %101 = vmatprep.subr.mxu0 0.0
    %102 = vmatpush1.msra.mxu0 0.0
    %103 = vmatprep.subr.mxu0 0.0
    %104 = vmatpush1.msra.mxu0 0.0
    %105 = vmatprep.subr.mxu0 0.0
    %106 = vmatpush1.msra.mxu0 0.0
    %107 = vmatprep.subr.mxu0 0.0
    %108 = vmatpush1.msra.mxu0 0.0
    %109 = vmatprep.subr.mxu0 0.0
    %110 = vmatpush1.msra.mxu0 0.0
    %111 = vmatprep.subr.mxu0 0.0
    %112 = vmatpush1.msra.mxu0 0.0
    %113 = vmatprep.subr.mxu0 0.0
    %114 = vmatpush1.msra.mxu0 0.0
    %115 = vmatprep.mubr.f32.mxu0 0.0
    %116 = vmatmul.mubr.f32.gmra.mrb[0].mxu0 %v27
    %v117 = vpop.f32.mrb[0].mxu0
    %v118 = vadd.f32 %v49, %v117
    %v119 = vpop.f32.mrb[0].mxu0
    %120 = vdwg.mxu0
    %v121 = vmul.f32 %v118, 0.01
    %v122 = vmax.f32 %v118, %v121
    %v123 = vld [vmem:[%s3] sm:$0xff]
    %v124 = vld [vmem:[%s3 + $0x8] sm:$0xff]
    %v125 = vld [vmem:[%s3 + $0x10] sm:$0xff]
    %v126 = vld [vmem:[%s3 + $0x18] sm:$0xff]
    %v127 = vld [vmem:[%s3 + $0x20] sm:$0xff]
    %v128 = vld [vmem:[%s3 + $0x28] sm:$0xff]
    %v129 = vld [vmem:[%s3 + $0x30] sm:$0xff]
    %v130 = vld [vmem:[%s3 + $0x38] sm:$0xff]
    %v131 = vld [vmem:[%s3 + $0x40] sm:$0xff]
    %v132 = vld [vmem:[%s3 + $0x48] sm:$0xff]
    %v133 = vld [vmem:[%s3 + $0x50] sm:$0xff]
    %v134 = vld [vmem:[%s3 + $0x58] sm:$0xff]
    %v135 = vld [vmem:[%s3 + $0x60] sm:$0xff]
    %v136 = vld [vmem:[%s3 + $0x68] sm:$0xff]
    %v137 = vld [vmem:[%s3 + $0x70] sm:$0xff]
    %v138 = vld [vmem:[%s3 + $0x78] sm:$0xff]
    %v139 = vld [vmem:[%s4] sm:$0x1]
    %v141 = vlaneseq
    %v142 = vshrl.u32 %v141, 7
    %v143 = vsub.s32 0, %v142
    %v144 = vrot.slane %v139, %v143
    %146 = vmatprep.subr.mxu0 0.0
    %147 = vmatpush1.msra.mxu0 %v123
    %148 = vmatprep.subr.mxu0 0.0
    %149 = vmatpush1.msra.mxu0 %v124
    %150 = vmatprep.subr.mxu0 0.0
    %151 = vmatpush1.msra.mxu0 %v125
    %152 = vmatprep.subr.mxu0 0.0
    %153 = vmatpush1.msra.mxu0 %v126
    %154 = vmatprep.subr.mxu0 0.0
    %155 = vmatpush1.msra.mxu0 %v127
    %156 = vmatprep.subr.mxu0 0.0
    %157 = vmatpush1.msra.mxu0 %v128
    %158 = vmatprep.subr.mxu0 0.0
    %159 = vmatpush1.msra.mxu0 %v129
    %160 = vmatprep.subr.mxu0 0.0
    %161 = vmatpush1.msra.mxu0 %v130
    %162 = vmatprep.subr.mxu0 0.0
    %163 = vmatpush1.msra.mxu0 %v131
    %164 = vmatprep.subr.mxu0 0.0
    %165 = vmatpush1.msra.mxu0 %v132
    %166 = vmatprep.subr.mxu0 0.0
    %167 = vmatpush1.msra.mxu0 %v133
    %168 = vmatprep.subr.mxu0 0.0
    %169 = vmatpush1.msra.mxu0 %v134
    %170 = vmatprep.subr.mxu0 0.0
    %171 = vmatpush1.msra.mxu0 %v135
    %172 = vmatprep.subr.mxu0 0.0
    %173 = vmatpush1.msra.mxu0 %v136
    %174 = vmatprep.subr.mxu0 0.0
    %175 = vmatpush1.msra.mxu0 %v137
    %176 = vmatprep.subr.mxu0 0.0
    %177 = vmatpush1.msra.mxu0 %v138
    %178 = vmatprep.subr.mxu0 0.0
    %179 = vmatpush1.msra.mxu0 0.0
    %180 = vmatprep.subr.mxu0 0.0
    %181 = vmatpush1.msra.mxu0 0.0
    %182 = vmatprep.subr.mxu0 0.0
    %183 = vmatpush1.msra.mxu0 0.0
    %184 = vmatprep.subr.mxu0 0.0
    %185 = vmatpush1.msra.mxu0 0.0
    %186 = vmatprep.subr.mxu0 0.0
    %187 = vmatpush1.msra.mxu0 0.0
    %188 = vmatprep.subr.mxu0 0.0
    %189 = vmatpush1.msra.mxu0 0.0
    %190 = vmatprep.subr.mxu0 0.0
    %191 = vmatpush1.msra.mxu0 0.0
    %192 = vmatprep.subr.mxu0 0.0
    %193 = vmatpush1.msra.mxu0 0.0
    %194 = vmatprep.subr.mxu0 0.0
    %195 = vmatpush1.msra.mxu0 0.0
    %196 = vmatprep.subr.mxu0 0.0
    %197 = vmatpush1.msra.mxu0 0.0
    %198 = vmatprep.subr.mxu0 0.0
    %199 = vmatpush1.msra.mxu0 0.0
    %200 = vmatprep.subr.mxu0 0.0
    %201 = vmatpush1.msra.mxu0 0.0
    %202 = vmatprep.subr.mxu0 0.0
    %203 = vmatpush1.msra.mxu0 0.0
    %204 = vmatprep.subr.mxu0 0.0
    %205 = vmatpush1.msra.mxu0 0.0
    %206 = vmatprep.subr.mxu0 0.0
    %207 = vmatpush1.msra.mxu0 0.0
    %208 = vmatprep.subr.mxu0 0.0
    %209 = vmatpush1.msra.mxu0 0.0
    %210 = vmatprep.mubr.f32.mxu0 0.0
    %211 = vmatmul.mubr.f32.gmra.mrb[0].mxu0 %v122
    %v212 = vpop.f32.mrb[0].mxu0
    %v213 = vadd.f32 %v144, %v212
    %v214 = vpop.f32.mrb[0].mxu0
    %215 = vdwg.mxu0
    %v216 = vmul.f32 %v213, 0.01
    %v217 = vmax.f32 %v213, %v216
    %218 = vmatprep.subr.mxu0 0.0
    %219 = vmatpush1.msra.mxu0 %v123
    %220 = vmatprep.subr.mxu0 0.0
    %221 = vmatpush1.msra.mxu0 %v124
    %222 = vmatprep.subr.mxu0 0.0
    %223 = vmatpush1.msra.mxu0 %v125
    %224 = vmatprep.subr.mxu0 0.0
    %225 = vmatpush1.msra.mxu0 %v126
    %226 = vmatprep.subr.mxu0 0.0
    %227 = vmatpush1.msra.mxu0 %v127
    %228 = vmatprep.subr.mxu0 0.0
    %229 = vmatpush1.msra.mxu0 %v128
    %230 = vmatprep.subr.mxu0 0.0
    %231 = vmatpush1.msra.mxu0 %v129
    %232 = vmatprep.subr.mxu0 0.0
    %233 = vmatpush1.msra.mxu0 %v130
    %234 = vmatprep.subr.mxu0 0.0
    %235 = vmatpush1.msra.mxu0 %v131
    %236 = vmatprep.subr.mxu0 0.0
    %237 = vmatpush1.msra.mxu0 %v132
    %238 = vmatprep.subr.mxu0 0.0
    %239 = vmatpush1.msra.mxu0 %v133
    %240 = vmatprep.subr.mxu0 0.0
    %241 = vmatpush1.msra.mxu0 %v134
    %242 = vmatprep.subr.mxu0 0.0
    %243 = vmatpush1.msra.mxu0 %v135
    %244 = vmatprep.subr.mxu0 0.0
    %245 = vmatpush1.msra.mxu0 %v136
    %246 = vmatprep.subr.mxu0 0.0
    %247 = vmatpush1.msra.mxu0 %v137
    %248 = vmatprep.subr.mxu0 0.0
    %249 = vmatpush1.msra.mxu0 %v138
    %250 = vmatprep.subr.mxu0 0.0
    %251 = vmatpush1.msra.mxu0 0.0
    %252 = vmatprep.subr.mxu0 0.0
    %253 = vmatpush1.msra.mxu0 0.0
    %254 = vmatprep.subr.mxu0 0.0
    %255 = vmatpush1.msra.mxu0 0.0
    %256 = vmatprep.subr.mxu0 0.0
    %257 = vmatpush1.msra.mxu0 0.0
    %258 = vmatprep.subr.mxu0 0.0
    %259 = vmatpush1.msra.mxu0 0.0
    %260 = vmatprep.subr.mxu0 0.0
    %261 = vmatpush1.msra.mxu0 0.0
    %262 = vmatprep.subr.mxu0 0.0
    %263 = vmatpush1.msra.mxu0 0.0
    %264 = vmatprep.subr.mxu0 0.0
    %265 = vmatpush1.msra.mxu0 0.0
    %266 = vmatprep.subr.mxu0 0.0
    %267 = vmatpush1.msra.mxu0 0.0
    %268 = vmatprep.subr.mxu0 0.0
    %269 = vmatpush1.msra.mxu0 0.0
    %270 = vmatprep.subr.mxu0 0.0
    %271 = vmatpush1.msra.mxu0 0.0
    %272 = vmatprep.subr.mxu0 0.0
    %273 = vmatpush1.msra.mxu0 0.0
    %274 = vmatprep.subr.mxu0 0.0
    %275 = vmatpush1.msra.mxu0 0.0
    %276 = vmatprep.subr.mxu0 0.0
    %277 = vmatpush1.msra.mxu0 0.0
    %278 = vmatprep.subr.mxu0 0.0
    %279 = vmatpush1.msra.mxu0 0.0
    %280 = vmatprep.subr.mxu0 0.0
    %281 = vmatpush1.msra.mxu0 0.0
    %282 = vmatprep.mubr.f32.mxu0 0.0
    %283 = vmatmul.mubr.f32.gmra.mrb[0].mxu0 %v217
    %v284 = vpop.f32.mrb[0].mxu0
    %v285 = vadd.f32 %v144, %v284
    %v286 = vpop.f32.mrb[0].mxu0
    %287 = vdwg.mxu0
    %v288 = vmul.f32 %v285, 0.01
    %v289 = vmax.f32 %v285, %v288
    %v290 = vld [vmem:[%s5] sm:$0xff]
    %v291 = vld [vmem:[%s5 + $0x8] sm:$0xff]
    %v292 = vld [vmem:[%s5 + $0x10] sm:$0xff]
    %v293 = vld [vmem:[%s5 + $0x18] sm:$0xff]
    %v294 = vld [vmem:[%s5 + $0x20] sm:$0xff]
    %v295 = vld [vmem:[%s5 + $0x28] sm:$0xff]
    %v296 = vld [vmem:[%s5 + $0x30] sm:$0xff]
    %v297 = vld [vmem:[%s5 + $0x38] sm:$0xff]
    %v298 = vld [vmem:[%s5 + $0x40] sm:$0xff]
    %v299 = vld [vmem:[%s5 + $0x48] sm:$0xff]
    %v300 = vld [vmem:[%s5 + $0x50] sm:$0xff]
    %v301 = vld [vmem:[%s5 + $0x58] sm:$0xff]
    %v302 = vld [vmem:[%s5 + $0x60] sm:$0xff]
    %v303 = vld [vmem:[%s5 + $0x68] sm:$0xff]
    %v304 = vld [vmem:[%s5 + $0x70] sm:$0xff]
    %v305 = vld [vmem:[%s5 + $0x78] sm:$0xff]
    %v306 = vld [vmem:[%s6] sm:$0x1]
    %v308 = vlaneseq
    %v309 = vshrl.u32 %v308, 7
    %v310 = vsub.s32 0, %v309
    %v311 = vrot.slane %v306, %v310
    %313 = vmatprep.subr.mxu0 0.0
    %314 = vmatpush1.msra.mxu0 %v290
    %315 = vmatprep.subr.mxu0 0.0
    %316 = vmatpush1.msra.mxu0 %v291
    %317 = vmatprep.subr.mxu0 0.0
    %318 = vmatpush1.msra.mxu0 %v292
    %319 = vmatprep.subr.mxu0 0.0
    %320 = vmatpush1.msra.mxu0 %v293
    %321 = vmatprep.subr.mxu0 0.0
    %322 = vmatpush1.msra.mxu0 %v294
    %323 = vmatprep.subr.mxu0 0.0
    %324 = vmatpush1.msra.mxu0 %v295
    %325 = vmatprep.subr.mxu0 0.0
    %326 = vmatpush1.msra.mxu0 %v296
    %327 = vmatprep.subr.mxu0 0.0
    %328 = vmatpush1.msra.mxu0 %v297
    %329 = vmatprep.subr.mxu0 0.0
    %330 = vmatpush1.msra.mxu0 %v298
    %331 = vmatprep.subr.mxu0 0.0
    %332 = vmatpush1.msra.mxu0 %v299
    %333 = vmatprep.subr.mxu0 0.0
    %334 = vmatpush1.msra.mxu0 %v300
    %335 = vmatprep.subr.mxu0 0.0
    %336 = vmatpush1.msra.mxu0 %v301
    %337 = vmatprep.subr.mxu0 0.0
    %338 = vmatpush1.msra.mxu0 %v302
    %339 = vmatprep.subr.mxu0 0.0
    %340 = vmatpush1.msra.mxu0 %v303
    %341 = vmatprep.subr.mxu0 0.0
    %342 = vmatpush1.msra.mxu0 %v304
    %343 = vmatprep.subr.mxu0 0.0
    %344 = vmatpush1.msra.mxu0 %v305
    %345 = vmatprep.subr.mxu0 0.0
    %346 = vmatpush1.msra.mxu0 0.0
    %347 = vmatprep.subr.mxu0 0.0
    %348 = vmatpush1.msra.mxu0 0.0
    %349 = vmatprep.subr.mxu0 0.0
    %350 = vmatpush1.msra.mxu0 0.0
    %351 = vmatprep.subr.mxu0 0.0
    %352 = vmatpush1.msra.mxu0 0.0
    %353 = vmatprep.subr.mxu0 0.0
    %354 = vmatpush1.msra.mxu0 0.0
    %355 = vmatprep.subr.mxu0 0.0
    %356 = vmatpush1.msra.mxu0 0.0
    %357 = vmatprep.subr.mxu0 0.0
    %358 = vmatpush1.msra.mxu0 0.0
    %359 = vmatprep.subr.mxu0 0.0
    %360 = vmatpush1.msra.mxu0 0.0
    %361 = vmatprep.subr.mxu0 0.0
    %362 = vmatpush1.msra.mxu0 0.0
    %363 = vmatprep.subr.mxu0 0.0
    %364 = vmatpush1.msra.mxu0 0.0
    %365 = vmatprep.subr.mxu0 0.0
    %366 = vmatpush1.msra.mxu0 0.0
    %367 = vmatprep.subr.mxu0 0.0
    %368 = vmatpush1.msra.mxu0 0.0
    %369 = vmatprep.subr.mxu0 0.0
    %370 = vmatpush1.msra.mxu0 0.0
    %371 = vmatprep.subr.mxu0 0.0
    %372 = vmatpush1.msra.mxu0 0.0
    %373 = vmatprep.subr.mxu0 0.0
    %374 = vmatpush1.msra.mxu0 0.0
    %375 = vmatprep.subr.mxu0 0.0
    %376 = vmatpush1.msra.mxu0 0.0
    %377 = vmatprep.mubr.f32.mxu0 0.0
    %378 = vmatmul.mubr.f32.gmra.mrb[0].mxu0 %v289
    %v379 = vpop.f32.mrb[0].mxu0
    %v380 = vadd.f32 %v311, %v379
    %v381 = vpop.f32.mrb[0].mxu0
    %382 = vdwg.mxu0
    %v383 = vmul.f32 %v380, 0.01
    %v384 = vmax.f32 %v380, %v383
    %385 = vst [vmem:[#allocation2] sm:$0xff] %v384
    // Predicated region
    $region30: #{my_net_forward.1} parent=1 // pred_check
      _
    $region31: #{my_net_forward.1} parent=1 // pred_check_branch
      %387 = sbr.rel (0) target = $region33
    $region32: #{my_net_forward.1} parent=1 // pred_region
      %s389 = ssub.s32 128, 128
      %390 = vsyncadd [#allocation3], %s389
      %s392 = sshll.u32 [#allocation2], 4
      %s393 = int_to_ptr.vmem [resolvable:$true] %s392
      %395 = dma.vmem_to_hbm [thread:$0]  %s393, 128, %s7, [#allocation3]
    $region33: #{my_net_forward.1} parent=1 // pred_fallthru
      _
    // Predicated region
    $region34: #{my_net_forward.1} parent=1 // pred_check
      _
    $region35: #{my_net_forward.1} parent=1 // pred_check_branch
      %397 = sbr.rel (0) target = $region37
    $region36: #{my_net_forward.1} parent=1 // pred_region
      %398 = dma.done [#allocation3], 128
    $region37: #{my_net_forward.1} parent=1 // pred_fallthru
      _
    %399 = vsyncpa [#allocation3], 1

</llo_original>
